<compile_context>
chip_gen: v7x
topology: tpu7x:2x2x1
jax: 0.10.0
libtpu: 0.0.40
codegen_flags: <defaults>
</compile_context>

<pallas_src>
import functools

import jax
import jax.numpy as jnp
from jax.experimental import pallas as pl
from jax.experimental.pallas import tpu as pltpu


# ----------------------------- parameter setup ------------------------------
# The cos/sin cache construction (_create_inv_freq + outer(t, inv_freq)) and
# the rope-scaling variants (dynamic / yarn / llama3 / su / longrope / mrope)
# are host-side parameter setup; they stay in plain JAX.  Only the per-token
# rotary hot path runs in the Pallas kernel.

def create_inv_freq(dim: int, base: float) -> jnp.ndarray:
    # 1.0 / base ** (arange(0, dim, 2) / dim)
    return 1.0 / (base ** (jnp.arange(0, dim, 2, dtype=jnp.float32) / dim))


def get_cos_sin(inv_freq, position_ids, max_position_embeddings,
                scaling_factor=None):
    # PositionRotaryEmbedding._update_cos_sin_cache + get_cos_sin
    t = jnp.arange(max_position_embeddings, dtype=jnp.float32)
    if scaling_factor is not None:
        t = t / scaling_factor
    freqs = jnp.outer(t, inv_freq)                       # [max_pos, dim/2]
    cos_cached = jnp.cos(freqs).astype(jnp.float32)
    sin_cached = jnp.sin(freqs).astype(jnp.float32)
    cos = cos_cached[position_ids][:, None, :]           # [T, 1, dim/2]
    sin = sin_cached[position_ids][:, None, :]
    return cos, sin


# --------------------------------- kernel -----------------------------------

def _rope_kernel(cos_ref, sin_ref, q_ref, k_ref, qo_ref, ko_ref, *,
                 half: int, rotary_dim: int, head_size: int):
    # cos_ref / sin_ref: (tile, 1, rotary_dim) f32.
    #   cos is the duplicated torch.cat((cos, cos), -1) table;
    #   sin has the rotate_half sign folded in: sin_signed = cat(-sin, sin).
    # Blockwise/NeoX rotary then becomes (per head row, lane axis = head dim):
    #   out = x * cos + roll(x, half, lanes) * sin_signed
    # The roll runs on the XLU slot (separate from VALU / vst), so no lane
    # slices or concatenates are needed.  Note roll by `half` over a width of
    # 2*half is direction-agnostic.
    cos = cos_ref[...]          # broadcasts over the (sublane) head axis
    sin = sin_ref[...]

    def rotate_into(x_ref, o_ref):
        x = x_ref[...]
        if rotary_dim == head_size:
            xf = x.astype(jnp.float32)
            rolled = pltpu.roll(xf, shift=half, axis=2)
            o_ref[...] = (xf * cos + rolled * sin).astype(o_ref.dtype)
        else:
            # Partial rotary: rotate only the leading rotary_dim lanes and
            # copy the pass-through tail directly (no f32 round-trip, no
            # concatenate).  (Unexercised by the demo below, which uses full
            # rotary like most production configs.)
            xr = x[:, :, :rotary_dim].astype(jnp.float32)
            rolled = pltpu.roll(xr, shift=half, axis=2)
            o_ref[:, :, :rotary_dim] = (xr * cos + rolled * sin).astype(o_ref.dtype)
            o_ref[:, :, rotary_dim:] = x[:, :, rotary_dim:]

    rotate_into(q_ref, qo_ref)
    rotate_into(k_ref, ko_ref)


# --------------------------------- wrapper ----------------------------------

_DEFAULT_VMEM_BLOCK_BUDGET = 16 * 1024 * 1024   # bytes of double-buffered blocks
_VMEM_LIMIT_BYTES = 32 * 1024 * 1024            # safe on v5e/v6e (128 MiB) and v7x (64 MiB)


def _choose_token_tile(T, H, KH, D, rd, q_itemsize, k_itemsize, budget_bytes):
    """Largest token tile whose double-buffered blocks fit the VMEM budget."""
    per_token = (
        4 * H * D * q_itemsize          # q: in + out blocks, 2 buffers each
        + 4 * KH * D * k_itemsize       # k: in + out blocks, 2 buffers each
        + 2 * 2 * 8 * rd * 4            # cos + sin: 2 buffers, (1, rd) pads to 8 sublanes
    )
    tile = max(1, budget_bytes // per_token)
    tile = min(tile, 1024, T)           # > ~1K tokens per DMA buys nothing more
    if tile >= T:
        return T                        # single block: full-dim block is always legal
    return min(T, max(8, (tile // 8) * 8))


def position_rotary_embedding_forward(query, key, cos, sin, *,
                                      token_tile=None,
                                      vmem_block_budget=_DEFAULT_VMEM_BLOCK_BUDGET,
                                      inplace=True):
    """Functional PositionRotaryEmbedding.forward (BLOCKWISE / NeoX mode).

    query: [num_tokens, num_heads, head_size]
    key:   [num_tokens, num_kv_heads, head_size]
    cos/sin: [num_tokens, 1, rotary_dim // 2]   (get_cos_sin output)
    Returns (rotated_query, rotated_key).  With inplace=True the outputs alias
    the query/key input buffers (matching the PyTorch in-place semantics).
    """
    T, H, D = query.shape
    Tk, KH, Dk = key.shape
    assert Tk == T and Dk == D
    half = cos.shape[-1]
    rd = 2 * half
    assert rd <= D

    # Fold torch.cat((cos, cos), -1) / cat((sin, sin), -1) and the rotate_half
    # sign into the (tiny) tables once, in plain JAX, so the kernel sees
    # lane-dense [T, 1, rotary_dim] blocks and needs no in-kernel slicing.
    cos2 = cos.reshape(T, 1, half).astype(jnp.float32)
    sin2 = sin.reshape(T, 1, half).astype(jnp.float32)
    cos_full = jnp.concatenate([cos2, cos2], axis=-1)        # [T, 1, rd]
    sin_signed = jnp.concatenate([-sin2, sin2], axis=-1)     # [T, 1, rd]

    if token_tile is None:
        token_tile = _choose_token_tile(
            T, H, KH, D, rd, query.dtype.itemsize, key.dtype.itemsize,
            vmem_block_budget)

    grid = (pl.cdiv(T, token_tile),)

    q_spec = pl.BlockSpec((token_tile, H, D), lambda i: (i, 0, 0))
    k_spec = pl.BlockSpec((token_tile, KH, D), lambda i: (i, 0, 0))
    cs_spec = pl.BlockSpec((token_tile, 1, rd), lambda i: (i, 0, 0))

    kernel = functools.partial(_rope_kernel, half=half, rotary_dim=rd,
                               head_size=D)

    return pl.pallas_call(
        kernel,
        out_shape=(jax.ShapeDtypeStruct(query.shape, query.dtype),
                   jax.ShapeDtypeStruct(key.shape, key.dtype)),
        grid=grid,
        in_specs=[cs_spec, cs_spec, q_spec, k_spec],
        out_specs=(q_spec, k_spec),
        input_output_aliases={2: 0, 3: 1} if inplace else {},
        compiler_params=pltpu.CompilerParams(
            dimension_semantics=("parallel",),
            vmem_limit_bytes=_VMEM_LIMIT_BYTES),
    )(cos_full, sin_signed, query, key)


# ----------------------------- plain-JAX reference ---------------------------

def _reference(query, key, cos, sin):
    half = cos.shape[-1]
    rd = 2 * half

    def rot(x):
        x1 = x[..., :half].astype(jnp.float32)
        x2 = x[..., half:rd].astype(jnp.float32)
        o1 = x1 * cos - x2 * sin
        o2 = x2 * cos + x1 * sin
        return jnp.concatenate([o1, o2, x[..., rd:].astype(jnp.float32)],
                               axis=-1).astype(x.dtype)

    return rot(query), rot(key)


# ----------------------------------- main ------------------------------------

if __name__ == "__main__":
    num_tokens = 32
    num_heads = 4
    num_kv_heads = 2
    head_size = 128              # lane-dense head dim (typical production size)
    rotary_dim = 128             # full rotary (kernel also supports partial)
    base = 10000.0
    max_position_embeddings = 64

    key0 = jax.random.PRNGKey(0)
    kq, kk = jax.random.split(key0)
    query = jax.random.normal(kq, (num_tokens, num_heads, head_size),
                              dtype=jnp.float32)
    key_t = jax.random.normal(kk, (num_tokens, num_kv_heads, head_size),
                              dtype=jnp.float32)
    position_ids = jnp.arange(num_tokens, dtype=jnp.int32)

    inv_freq = create_inv_freq(rotary_dim, base)
    cos, sin = get_cos_sin(inv_freq, position_ids, max_position_embeddings,
                           scaling_factor=None)

    q_shape, q_dtype = query.shape, query.dtype
    k_shape, k_dtype = key_t.shape, key_t.dtype

    # Compute the reference BEFORE the kernel call: q/k buffers are donated for
    # the in-place update (mirrors the module's in-place copy_ semantics).
    q_ref, k_ref = _reference(query, key_t, cos, sin)
    q_ref, k_ref = jax.block_until_ready((q_ref, k_ref))

    rope = jax.jit(position_rotary_embedding_forward, donate_argnums=(0, 1))
    q_out, k_out = rope(query, key_t, cos, sin)
    q_out, k_out = jax.block_until_ready((q_out, k_out))

    assert q_out.shape == q_shape and q_out.dtype == q_dtype
    assert k_out.shape == k_shape and k_out.dtype == k_dtype
    assert jnp.allclose(q_out, q_ref, atol=1e-5, rtol=1e-5)
    assert jnp.allclose(k_out, k_ref, atol=1e-5, rtol=1e-5)

    print("KERNEL_OK")
</pallas_src>

<mosaic_0001>
module attributes {stable_mosaic.version = 11 : i64} {
  func.func @_rope_kernel(%arg0: i32, %arg1: memref<32x1x128xf32, #tpu.memory_space<vmem>>, %arg2: memref<32x1x128xf32, #tpu.memory_space<vmem>>, %arg3: memref<32x4x128xf32, #tpu.memory_space<vmem>>, %arg4: memref<32x2x128xf32, #tpu.memory_space<vmem>>, %arg5: memref<32x4x128xf32, #tpu.memory_space<vmem>>, %arg6: memref<32x2x128xf32, #tpu.memory_space<vmem>>) attributes {dimension_semantics = [#tpu.dimension_semantics<parallel>], iteration_bounds = array<i64: 1>, scalar_prefetch = 0 : i64, scratch_operands = 0 : i64, tpu.core_type = #tpu.core_type<tc>, window_params = [{transform_indices = @transform_0, window_bounds = array<i64: 32, 1, 128>}, {transform_indices = @transform_1, window_bounds = array<i64: 32, 1, 128>}, {transform_indices = @transform_2, window_bounds = array<i64: 32, 4, 128>}, {transform_indices = @transform_3, window_bounds = array<i64: 32, 2, 128>}, {transform_indices = @transform_4, window_bounds = array<i64: 32, 4, 128>}, {transform_indices = @transform_5, window_bounds = array<i64: 32, 2, 128>}]} {
    %c0 = arith.constant 0 : index
    %c0_0 = arith.constant 0 : index
    %c0_1 = arith.constant 0 : index
    %0 = vector.load %arg1[%c0, %c0_0, %c0_1] : memref<32x1x128xf32, #tpu.memory_space<vmem>>, vector<32x1x128xf32>
    %c0_2 = arith.constant 0 : index
    %c0_3 = arith.constant 0 : index
    %c0_4 = arith.constant 0 : index
    %1 = vector.load %arg2[%c0_2, %c0_3, %c0_4] : memref<32x1x128xf32, #tpu.memory_space<vmem>>, vector<32x1x128xf32>
    %c0_5 = arith.constant 0 : index
    %c0_6 = arith.constant 0 : index
    %c0_7 = arith.constant 0 : index
    %2 = vector.load %arg3[%c0_5, %c0_6, %c0_7] : memref<32x4x128xf32, #tpu.memory_space<vmem>>, vector<32x4x128xf32>
    %c64_i32 = arith.constant 64 : i32
    %3 = tpu.dynamic_rotate %2 by %c64_i32 dim 2 : vector<32x4x128xf32>, i32 -> vector<32x4x128xf32>
    %4 = vector.broadcast %0 : vector<32x1x128xf32> to vector<32x4x128xf32>
    %5 = arith.mulf %2, %4 : vector<32x4x128xf32>
    %6 = vector.broadcast %1 : vector<32x1x128xf32> to vector<32x4x128xf32>
    %7 = arith.mulf %3, %6 : vector<32x4x128xf32>
    %8 = arith.addf %5, %7 : vector<32x4x128xf32>
    %c0_8 = arith.constant 0 : index
    %c0_9 = arith.constant 0 : index
    %c0_10 = arith.constant 0 : index
    %9 = vector.load %arg5[%c0_8, %c0_9, %c0_10] : memref<32x4x128xf32, #tpu.memory_space<vmem>>, vector<32x4x128xf32>
    tpu.vector_store %arg5[%c0_8, %c0_9, %c0_10], %8 {strides = array<i32>} : memref<32x4x128xf32, #tpu.memory_space<vmem>>, vector<32x4x128xf32>,
    %c0_11 = arith.constant 0 : index
    %c0_12 = arith.constant 0 : index
    %c0_13 = arith.constant 0 : index
    %10 = vector.load %arg4[%c0_11, %c0_12, %c0_13] : memref<32x2x128xf32, #tpu.memory_space<vmem>>, vector<32x2x128xf32>
    %c64_i32_14 = arith.constant 64 : i32
    %11 = tpu.dynamic_rotate %10 by %c64_i32_14 dim 2 : vector<32x2x128xf32>, i32 -> vector<32x2x128xf32>
    %12 = vector.broadcast %0 : vector<32x1x128xf32> to vector<32x2x128xf32>
    %13 = arith.mulf %10, %12 : vector<32x2x128xf32>
    %14 = vector.broadcast %1 : vector<32x1x128xf32> to vector<32x2x128xf32>
    %15 = arith.mulf %11, %14 : vector<32x2x128xf32>
    %16 = arith.addf %13, %15 : vector<32x2x128xf32>
    %c0_15 = arith.constant 0 : index
    %c0_16 = arith.constant 0 : index
    %c0_17 = arith.constant 0 : index
    %17 = vector.load %arg6[%c0_15, %c0_16, %c0_17] : memref<32x2x128xf32, #tpu.memory_space<vmem>>, vector<32x2x128xf32>
    tpu.vector_store %arg6[%c0_15, %c0_16, %c0_17], %16 {strides = array<i32>} : memref<32x2x128xf32, #tpu.memory_space<vmem>>, vector<32x2x128xf32>,
    return
  }
  func.func @transform_0(%arg0: i32) -> (i32, i32, i32) {
    %c0_i32 = arith.constant 0 : i32
    %c0_i32_0 = arith.constant 0 : i32
    %c0_i32_1 = arith.constant 0 : i32
    return %arg0, %c0_i32, %c0_i32_0 : i32, i32, i32
  }
  func.func @transform_1(%arg0: i32) -> (i32, i32, i32) {
    %c0_i32 = arith.constant 0 : i32
    %c0_i32_0 = arith.constant 0 : i32
    %c0_i32_1 = arith.constant 0 : i32
    return %arg0, %c0_i32, %c0_i32_0 : i32, i32, i32
  }
  func.func @transform_2(%arg0: i32) -> (i32, i32, i32) {
    %c0_i32 = arith.constant 0 : i32
    %c0_i32_0 = arith.constant 0 : i32
    %c0_i32_1 = arith.constant 0 : i32
    return %arg0, %c0_i32, %c0_i32_0 : i32, i32, i32
  }
  func.func @transform_3(%arg0: i32) -> (i32, i32, i32) {
    %c0_i32 = arith.constant 0 : i32
    %c0_i32_0 = arith.constant 0 : i32
    %c0_i32_1 = arith.constant 0 : i32
    return %arg0, %c0_i32, %c0_i32_0 : i32, i32, i32
  }
  func.func @transform_4(%arg0: i32) -> (i32, i32, i32) {
    %c0_i32 = arith.constant 0 : i32
    %c0_i32_0 = arith.constant 0 : i32
    %c0_i32_1 = arith.constant 0 : i32
    return %arg0, %c0_i32, %c0_i32_0 : i32, i32, i32
  }
  func.func @transform_5(%arg0: i32) -> (i32, i32, i32) {
    %c0_i32 = arith.constant 0 : i32
    %c0_i32_0 = arith.constant 0 : i32
    %c0_i32_1 = arith.constant 0 : i32
    return %arg0, %c0_i32, %c0_i32_0 : i32, i32, i32
  }
}

</mosaic_0001>

<llo_original>
// kernel: neg.1
$region0: #{neg.1}
  #allocation2 [shape = 's32[1]{0}', space=sflag, size = 0x4, scoped, tag = 'scoped memory for neg.1']
  %s0 = inlined_call_operand.hbm [shape: f32[32,1,64], index: 0, kind: input, shape index: {}]
  %s1 = inlined_call_operand.vmem [shape: f32[32,1,64], index: 1, kind: output, shape index: {}]
  $region1: #{neg.1} parent=0
    #allocation0 [shape = 'u8[16384]{0}', space=vmem, size = 0x4000, scoped, tag = 'operand span for operand 0']
    #allocation1 [shape = 's32[1]{0}', space=sflag, size = 0x4, scoped, tag = 'scoped memory for neg.1']
    %2 = vsyncpa [#allocation1], 0
    %s4 = ssub.s32 512, 512
    %5 = vsyncadd [#allocation1], %s4
    %s6 = sshll.u32 [#allocation0], 4
    %s7 = int_to_ptr.vmem [resolvable:$true] %s6
    %12 = dma.hbm_to_vmem [thread:$0]  %s0, 512, %s7, [#allocation1], 16, 16, 1
    %13 = dma.done [#allocation1], 512
    %v14 = vld [vmem:[#allocation0] sm:$0x1]
    %15 = xla_tuple %v14
    %16 = xla_tuple %15
    %v17 = vxor.u32 %v14, 2147483648
    %18 = xla_tuple %v17
    %19 = vst [vmem:[%s1] sm:$0x1] %v17
    %s20 = scalar_lea.vmem [#allocation0], 1
    %v21 = vld [vmem:[%s20] sm:$0x1]
    %22 = xla_tuple %v21
    %23 = xla_tuple %22
    %v24 = vxor.u32 %v21, 2147483648
    %25 = xla_tuple %v24
    %s26 = scalar_lea.vmem %s1, 1
    %27 = vst [vmem:[%s26] sm:$0x1] %v24
    %s28 = scalar_lea.vmem [#allocation0], 2
    %v29 = vld [vmem:[%s28] sm:$0x1]
    %30 = xla_tuple %v29
    %31 = xla_tuple %30
    %v32 = vxor.u32 %v29, 2147483648
    %33 = xla_tuple %v32
    %s34 = scalar_lea.vmem %s1, 2
    %35 = vst [vmem:[%s34] sm:$0x1] %v32
    %s36 = scalar_lea.vmem [#allocation0], 3
    %v37 = vld [vmem:[%s36] sm:$0x1]
    %38 = xla_tuple %v37
    %39 = xla_tuple %38
    %v40 = vxor.u32 %v37, 2147483648
    %41 = xla_tuple %v40
    %s42 = scalar_lea.vmem %s1, 3
    %43 = vst [vmem:[%s42] sm:$0x1] %v40
    %s44 = scalar_lea.vmem [#allocation0], 4
    %v45 = vld [vmem:[%s44] sm:$0x1]
    %46 = xla_tuple %v45
    %47 = xla_tuple %46
    %v48 = vxor.u32 %v45, 2147483648
    %49 = xla_tuple %v48
    %s50 = scalar_lea.vmem %s1, 4
    %51 = vst [vmem:[%s50] sm:$0x1] %v48
    %s52 = scalar_lea.vmem [#allocation0], 5
    %v53 = vld [vmem:[%s52] sm:$0x1]
    %54 = xla_tuple %v53
    %55 = xla_tuple %54
    %v56 = vxor.u32 %v53, 2147483648
    %57 = xla_tuple %v56
    %s58 = scalar_lea.vmem %s1, 5
    %59 = vst [vmem:[%s58] sm:$0x1] %v56
    %s60 = scalar_lea.vmem [#allocation0], 6
    %v61 = vld [vmem:[%s60] sm:$0x1]
    %62 = xla_tuple %v61
    %63 = xla_tuple %62
    %v64 = vxor.u32 %v61, 2147483648
    %65 = xla_tuple %v64
    %s66 = scalar_lea.vmem %s1, 6
    %67 = vst [vmem:[%s66] sm:$0x1] %v64
    %s68 = scalar_lea.vmem [#allocation0], 7
    %v69 = vld [vmem:[%s68] sm:$0x1]
    %70 = xla_tuple %v69
    %71 = xla_tuple %70
    %v72 = vxor.u32 %v69, 2147483648
    %73 = xla_tuple %v72
    %s74 = scalar_lea.vmem %s1, 7
    %75 = vst [vmem:[%s74] sm:$0x1] %v72
    %s76 = scalar_lea.vmem [#allocation0], 8
    %v77 = vld [vmem:[%s76] sm:$0x1]
    %78 = xla_tuple %v77
    %79 = xla_tuple %78
    %v80 = vxor.u32 %v77, 2147483648
    %81 = xla_tuple %v80
    %s82 = scalar_lea.vmem %s1, 8
    %83 = vst [vmem:[%s82] sm:$0x1] %v80
    %s84 = scalar_lea.vmem [#allocation0], 9
    %v85 = vld [vmem:[%s84] sm:$0x1]
    %86 = xla_tuple %v85
    %87 = xla_tuple %86
    %v88 = vxor.u32 %v85, 2147483648
    %89 = xla_tuple %v88
    %s90 = scalar_lea.vmem %s1, 9
    %91 = vst [vmem:[%s90] sm:$0x1] %v88
    %s92 = scalar_lea.vmem [#allocation0], 10
    %v93 = vld [vmem:[%s92] sm:$0x1]
    %94 = xla_tuple %v93
    %95 = xla_tuple %94
    %v96 = vxor.u32 %v93, 2147483648
    %97 = xla_tuple %v96
    %s98 = scalar_lea.vmem %s1, 10
    %99 = vst [vmem:[%s98] sm:$0x1] %v96
    %s100 = scalar_lea.vmem [#allocation0], 11
    %v101 = vld [vmem:[%s100] sm:$0x1]
    %102 = xla_tuple %v101
    %103 = xla_tuple %102
    %v104 = vxor.u32 %v101, 2147483648
    %105 = xla_tuple %v104
    %s106 = scalar_lea.vmem %s1, 11
    %107 = vst [vmem:[%s106] sm:$0x1] %v104
    %s108 = scalar_lea.vmem [#allocation0], 12
    %v109 = vld [vmem:[%s108] sm:$0x1]
    %110 = xla_tuple %v109
    %111 = xla_tuple %110
    %v112 = vxor.u32 %v109, 2147483648
    %113 = xla_tuple %v112
    %s114 = scalar_lea.vmem %s1, 12
    %115 = vst [vmem:[%s114] sm:$0x1] %v112
    %s116 = scalar_lea.vmem [#allocation0], 13
    %v117 = vld [vmem:[%s116] sm:$0x1]
    %118 = xla_tuple %v117
    %119 = xla_tuple %118
    %v120 = vxor.u32 %v117, 2147483648
    %121 = xla_tuple %v120
    %s122 = scalar_lea.vmem %s1, 13
    %123 = vst [vmem:[%s122] sm:$0x1] %v120
    %s124 = scalar_lea.vmem [#allocation0], 14
    %v125 = vld [vmem:[%s124] sm:$0x1]
    %126 = xla_tuple %v125
    %127 = xla_tuple %126
    %v128 = vxor.u32 %v125, 2147483648
    %129 = xla_tuple %v128
    %s130 = scalar_lea.vmem %s1, 14
    %131 = vst [vmem:[%s130] sm:$0x1] %v128
    %s132 = scalar_lea.vmem [#allocation0], 15
    %v133 = vld [vmem:[%s132] sm:$0x1]
    %134 = xla_tuple %v133
    %135 = xla_tuple %134
    %v136 = vxor.u32 %v133, 2147483648
    %137 = xla_tuple %v136
    %s138 = scalar_lea.vmem %s1, 15
    %139 = vst [vmem:[%s138] sm:$0x1] %v136
    %s140 = scalar_lea.vmem [#allocation0], 16
    %v141 = vld [vmem:[%s140] sm:$0x1]
    %142 = xla_tuple %v141
    %143 = xla_tuple %142
    %v144 = vxor.u32 %v141, 2147483648
    %145 = xla_tuple %v144
    %s146 = scalar_lea.vmem %s1, 16
    %147 = vst [vmem:[%s146] sm:$0x1] %v144
    %s148 = scalar_lea.vmem [#allocation0], 17
    %v149 = vld [vmem:[%s148] sm:$0x1]
    %150 = xla_tuple %v149
    %151 = xla_tuple %150
    %v152 = vxor.u32 %v149, 2147483648
    %153 = xla_tuple %v152
    %s154 = scalar_lea.vmem %s1, 17
    %155 = vst [vmem:[%s154] sm:$0x1] %v152
    %s156 = scalar_lea.vmem [#allocation0], 18
    %v157 = vld [vmem:[%s156] sm:$0x1]
    %158 = xla_tuple %v157
    %159 = xla_tuple %158
    %v160 = vxor.u32 %v157, 2147483648
    %161 = xla_tuple %v160
    %s162 = scalar_lea.vmem %s1, 18
    %163 = vst [vmem:[%s162] sm:$0x1] %v160
    %s164 = scalar_lea.vmem [#allocation0], 19
    %v165 = vld [vmem:[%s164] sm:$0x1]
    %166 = xla_tuple %v165
    %167 = xla_tuple %166
    %v168 = vxor.u32 %v165, 2147483648
    %169 = xla_tuple %v168
    %s170 = scalar_lea.vmem %s1, 19
    %171 = vst [vmem:[%s170] sm:$0x1] %v168
    %s172 = scalar_lea.vmem [#allocation0], 20
    %v173 = vld [vmem:[%s172] sm:$0x1]
    %174 = xla_tuple %v173
    %175 = xla_tuple %174
    %v176 = vxor.u32 %v173, 2147483648
    %177 = xla_tuple %v176
    %s178 = scalar_lea.vmem %s1, 20
    %179 = vst [vmem:[%s178] sm:$0x1] %v176
    %s180 = scalar_lea.vmem [#allocation0], 21
    %v181 = vld [vmem:[%s180] sm:$0x1]
    %182 = xla_tuple %v181
    %183 = xla_tuple %182
    %v184 = vxor.u32 %v181, 2147483648
    %185 = xla_tuple %v184
    %s186 = scalar_lea.vmem %s1, 21
    %187 = vst [vmem:[%s186] sm:$0x1] %v184
    %s188 = scalar_lea.vmem [#allocation0], 22
    %v189 = vld [vmem:[%s188] sm:$0x1]
    %190 = xla_tuple %v189
    %191 = xla_tuple %190
    %v192 = vxor.u32 %v189, 2147483648
    %193 = xla_tuple %v192
    %s194 = scalar_lea.vmem %s1, 22
    %195 = vst [vmem:[%s194] sm:$0x1] %v192
    %s196 = scalar_lea.vmem [#allocation0], 23
    %v197 = vld [vmem:[%s196] sm:$0x1]
    %198 = xla_tuple %v197
    %199 = xla_tuple %198
    %v200 = vxor.u32 %v197, 2147483648
    %201 = xla_tuple %v200
    %s202 = scalar_lea.vmem %s1, 23
    %203 = vst [vmem:[%s202] sm:$0x1] %v200
    %s204 = scalar_lea.vmem [#allocation0], 24
    %v205 = vld [vmem:[%s204] sm:$0x1]
    %206 = xla_tuple %v205
    %207 = xla_tuple %206
    %v208 = vxor.u32 %v205, 2147483648
    %209 = xla_tuple %v208
    %s210 = scalar_lea.vmem %s1, 24
    %211 = vst [vmem:[%s210] sm:$0x1] %v208
    %s212 = scalar_lea.vmem [#allocation0], 25
    %v213 = vld [vmem:[%s212] sm:$0x1]
    %214 = xla_tuple %v213
    %215 = xla_tuple %214
    %v216 = vxor.u32 %v213, 2147483648
    %217 = xla_tuple %v216
    %s218 = scalar_lea.vmem %s1, 25
    %219 = vst [vmem:[%s218] sm:$0x1] %v216
    %s220 = scalar_lea.vmem [#allocation0], 26
    %v221 = vld [vmem:[%s220] sm:$0x1]
    %222 = xla_tuple %v221
    %223 = xla_tuple %222
    %v224 = vxor.u32 %v221, 2147483648
    %225 = xla_tuple %v224
    %s226 = scalar_lea.vmem %s1, 26
    %227 = vst [vmem:[%s226] sm:$0x1] %v224
    %s228 = scalar_lea.vmem [#allocation0], 27
    %v229 = vld [vmem:[%s228] sm:$0x1]
    %230 = xla_tuple %v229
    %231 = xla_tuple %230
    %v232 = vxor.u32 %v229, 2147483648
    %233 = xla_tuple %v232
    %s234 = scalar_lea.vmem %s1, 27
    %235 = vst [vmem:[%s234] sm:$0x1] %v232
    %s236 = scalar_lea.vmem [#allocation0], 28
    %v237 = vld [vmem:[%s236] sm:$0x1]
    %238 = xla_tuple %v237
    %239 = xla_tuple %238
    %v240 = vxor.u32 %v237, 2147483648
    %241 = xla_tuple %v240
    %s242 = scalar_lea.vmem %s1, 28
    %243 = vst [vmem:[%s242] sm:$0x1] %v240
    %s244 = scalar_lea.vmem [#allocation0], 29
    %v245 = vld [vmem:[%s244] sm:$0x1]
    %246 = xla_tuple %v245
    %247 = xla_tuple %246
    %v248 = vxor.u32 %v245, 2147483648
    %249 = xla_tuple %v248
    %s250 = scalar_lea.vmem %s1, 29
    %251 = vst [vmem:[%s250] sm:$0x1] %v248
    %s252 = scalar_lea.vmem [#allocation0], 30
    %v253 = vld [vmem:[%s252] sm:$0x1]
    %254 = xla_tuple %v253
    %255 = xla_tuple %254
    %v256 = vxor.u32 %v253, 2147483648
    %257 = xla_tuple %v256
    %s258 = scalar_lea.vmem %s1, 30
    %259 = vst [vmem:[%s258] sm:$0x1] %v256
    %s260 = scalar_lea.vmem [#allocation0], 31
    %v261 = vld [vmem:[%s260] sm:$0x1]
    %262 = xla_tuple %v261
    %263 = xla_tuple %262
    %v264 = vxor.u32 %v261, 2147483648
    %265 = xla_tuple %v264
    %s266 = scalar_lea.vmem %s1, 31
    %267 = vst [vmem:[%s266] sm:$0x1] %v264
    %268 = vsyncpa [#allocation1], 1

// kernel: position_rotary_embedding_forward.1
$region0: #{position_rotary_embedding_forward.1}
  #allocation0 [shape = 'u32[]', space=smem, size = 0x4, offset = 0x4, fixed_abs, tag = 'smem constant byte address 0x4 - core index']
  #allocation1 [shape = 'u32[144,128]{1,0:T(1,128)}', space=vmem, size = 0x12000, scoped, tag = 'internal scratch']
  %s0 = inlined_call_operand.vmem [shape: f32[32,1,128], index: 0, kind: input, shape index: {}]
  %s1 = inlined_call_operand.vmem [shape: f32[32,1,128], index: 1, kind: input, shape index: {}]
  %s2 = inlined_call_operand.hbm [shape: f32[32,4,128], index: 2, kind: input, shape index: {}, may-alias: {2,4}]
  %s3 = inlined_call_operand.hbm [shape: f32[32,2,128], index: 3, kind: input, shape index: {}, may-alias: {3,5}]
  %s4 = inlined_call_operand.hbm [shape: f32[32,4,128], index: 4, kind: output, shape index: {0}, may-alias: {2,4}]
  %s5 = inlined_call_operand.hbm [shape: f32[32,2,128], index: 5, kind: output, shape index: {1}, may-alias: {3,5}]
  %6 = xla_tuple %s4, %s5
  %s7 = sld [smem:[#allocation0]]
  $region42: #{position_rotary_embedding_forward.1} parent=0
    _
  %s9 = ssub.s32 1, %s7
  %s10 = scalar_select 0, %s9, %s7
  $region1: #{position_rotary_embedding_forward.1} parent=0
    #allocation2 [shape = 'u8[65536]{0}', space=vmem, size = 0x10000, scoped, tag = 'input window, operand 2, single buffered']
    #allocation3 [shape = 's32[1]{0}', space=sflag, size = 0x4, scoped, tag = 'scoped memory for position_rotary_embedding_forward.1']
    #allocation4 [shape = 's32[1]{0}', space=sflag, size = 0x4, scoped, tag = 'scoped memory for position_rotary_embedding_forward.1']
    #allocation5 [shape = 'u8[32768]{0}', space=vmem, size = 0x8000, scoped, tag = 'input window, operand 3, single buffered']
    #allocation6 [shape = 's32[1]{0}', space=sflag, size = 0x4, scoped, tag = 'scoped memory for position_rotary_embedding_forward.1']
    #allocation7 [shape = 'u8[65536]{0}', space=vmem, size = 0x10000, scoped, tag = 'output window, operand 0, single buffered']
    #allocation8 [shape = 'u8[32768]{0}', space=vmem, size = 0x8000, scoped, tag = 'output window, operand 1, single buffered']
    #allocation9 [shape = 's32[1]{0}', space=sflag, size = 0x4, scoped, tag = 'scoped memory for position_rotary_embedding_forward.1']
    %11 = vsyncpa [#allocation3], 0
    %12 = vsyncpa [#allocation6], 0
    %13 = vsyncpa [#allocation4], 0
    %14 = vsyncpa [#allocation9], 0
    // Predicated region
    $region2: #{position_rotary_embedding_forward.1} parent=1 // pred_check
      _
    $region3: #{position_rotary_embedding_forward.1} parent=1 // pred_check_branch
      %16 = sbr.rel (0) target = $region5
    $region4: #{position_rotary_embedding_forward.1} parent=1 // pred_region
      _
    $region5: #{position_rotary_embedding_forward.1} parent=1 // pred_fallthru
      _
    // Predicated region
    $region6: #{position_rotary_embedding_forward.1} parent=1 // pred_check
      _
    $region7: #{position_rotary_embedding_forward.1} parent=1 // pred_check_branch
      %18 = sbr.rel (0) target = $region9
    $region8: #{position_rotary_embedding_forward.1} parent=1 // pred_region
      _
    $region9: #{position_rotary_embedding_forward.1} parent=1 // pred_fallthru
      _
    // Predicated region
    $region10: #{position_rotary_embedding_forward.1} parent=1 // pred_check
      _
    $region11: #{position_rotary_embedding_forward.1} parent=1 // pred_check_branch
      %20 = sbr.rel (0) target = $region13
    $region12: #{position_rotary_embedding_forward.1} parent=1 // pred_region
      %s22 = ssub.s32 2048, 2048
      %23 = vsyncadd [#allocation3], %s22
      %s24 = sshll.u32 [#allocation2], 4
      %s25 = int_to_ptr.vmem [resolvable:$true] %s24
      %30 = dma.hbm_to_vmem [thread:$0]  %s2, 2048, %s25, [#allocation3], 64, 64, 4
    $region13: #{position_rotary_embedding_forward.1} parent=1 // pred_fallthru
      _
    // Predicated region
    $region14: #{position_rotary_embedding_forward.1} parent=1 // pred_check
      _
    $region15: #{position_rotary_embedding_forward.1} parent=1 // pred_check_branch
      %32 = sbr.rel (0) target = $region17
    $region16: #{position_rotary_embedding_forward.1} parent=1 // pred_region
      %s34 = ssub.s32 1024, 1024
      %35 = vsyncadd [#allocation6], %s34
      %s36 = sshll.u32 [#allocation5], 4
      %s37 = int_to_ptr.vmem [resolvable:$true] %s36
      %42 = dma.hbm_to_vmem [thread:$0]  %s3, 1024, %s37, [#allocation6], 32, 32, 2
    $region17: #{position_rotary_embedding_forward.1} parent=1 // pred_fallthru
      _
    // Predicated region
    $region18: #{position_rotary_embedding_forward.1} parent=1 // pred_check
      _
    $region19: #{position_rotary_embedding_forward.1} parent=1 // pred_check_branch
      %44 = sbr.rel (0) target = $region21
    $region20: #{position_rotary_embedding_forward.1} parent=1 // pred_region
      %45 = dma.done [#allocation3], 2048
    $region21: #{position_rotary_embedding_forward.1} parent=1 // pred_fallthru
      _
    // Predicated region
    $region22: #{position_rotary_embedding_forward.1} parent=1 // pred_check
      _
    $region23: #{position_rotary_embedding_forward.1} parent=1 // pred_check_branch
      %47 = sbr.rel (0) target = $region25
    $region24: #{position_rotary_embedding_forward.1} parent=1 // pred_region
      %48 = dma.done [#allocation6], 1024
    $region25: #{position_rotary_embedding_forward.1} parent=1 // pred_fallthru
      _
    %v49 = vld [vmem:[%s0] sm:$0x1]
    %v50 = vld [vmem:[%s0 + $0x1] sm:$0x1]
    %v51 = vld [vmem:[%s0 + $0x2] sm:$0x1]
    %v52 = vld [vmem:[%s0 + $0x3] sm:$0x1]
    %v53 = vld [vmem:[%s0 + $0x4] sm:$0x1]
    %v54 = vld [vmem:[%s0 + $0x5] sm:$0x1]
    %v55 = vld [vmem:[%s0 + $0x6] sm:$0x1]
    %v56 = vld [vmem:[%s0 + $0x7] sm:$0x1]
    %v57 = vld [vmem:[%s0 + $0x8] sm:$0x1]
    %v58 = vld [vmem:[%s0 + $0x9] sm:$0x1]
    %v59 = vld [vmem:[%s0 + $0xa] sm:$0x1]
    %v60 = vld [vmem:[%s0 + $0xb] sm:$0x1]
    %v61 = vld [vmem:[%s0 + $0xc] sm:$0x1]
    %v62 = vld [vmem:[%s0 + $0xd] sm:$0x1]
    %v63 = vld [vmem:[%s0 + $0xe] sm:$0x1]
    %v64 = vld [vmem:[%s0 + $0xf] sm:$0x1]
    %v65 = vld [vmem:[%s0 + $0x10] sm:$0x1]
    %v66 = vld [vmem:[%s0 + $0x11] sm:$0x1]
    %v67 = vld [vmem:[%s0 + $0x12] sm:$0x1]
    %v68 = vld [vmem:[%s0 + $0x13] sm:$0x1]
    %v69 = vld [vmem:[%s0 + $0x14] sm:$0x1]
    %v70 = vld [vmem:[%s0 + $0x15] sm:$0x1]
    %v71 = vld [vmem:[%s0 + $0x16] sm:$0x1]
    %v72 = vld [vmem:[%s0 + $0x17] sm:$0x1]
    %v73 = vld [vmem:[%s0 + $0x18] sm:$0x1]
    %v74 = vld [vmem:[%s0 + $0x19] sm:$0x1]
    %v75 = vld [vmem:[%s0 + $0x1a] sm:$0x1]
    %v76 = vld [vmem:[%s0 + $0x1b] sm:$0x1]
    %v77 = vld [vmem:[%s0 + $0x1c] sm:$0x1]
    %v78 = vld [vmem:[%s0 + $0x1d] sm:$0x1]
    %v79 = vld [vmem:[%s0 + $0x1e] sm:$0x1]
    %v80 = vld [vmem:[%s0 + $0x1f] sm:$0x1]
    %v81 = vld [vmem:[%s1] sm:$0x1]
    %v82 = vld [vmem:[%s1 + $0x1] sm:$0x1]
    %v83 = vld [vmem:[%s1 + $0x2] sm:$0x1]
    %v84 = vld [vmem:[%s1 + $0x3] sm:$0x1]
    %v85 = vld [vmem:[%s1 + $0x4] sm:$0x1]
    %v86 = vld [vmem:[%s1 + $0x5] sm:$0x1]
    %v87 = vld [vmem:[%s1 + $0x6] sm:$0x1]
    %v88 = vld [vmem:[%s1 + $0x7] sm:$0x1]
    %v89 = vld [vmem:[%s1 + $0x8] sm:$0x1]
    %v90 = vld [vmem:[%s1 + $0x9] sm:$0x1]
    %v91 = vld [vmem:[%s1 + $0xa] sm:$0x1]
    %v92 = vld [vmem:[%s1 + $0xb] sm:$0x1]
    %v93 = vld [vmem:[%s1 + $0xc] sm:$0x1]
    %v94 = vld [vmem:[%s1 + $0xd] sm:$0x1]
    %v95 = vld [vmem:[%s1 + $0xe] sm:$0x1]
    %v96 = vld [vmem:[%s1 + $0xf] sm:$0x1]
    %v97 = vld [vmem:[%s1 + $0x10] sm:$0x1]
    %v98 = vld [vmem:[%s1 + $0x11] sm:$0x1]
    %v99 = vld [vmem:[%s1 + $0x12] sm:$0x1]
    %v100 = vld [vmem:[%s1 + $0x13] sm:$0x1]
    %v101 = vld [vmem:[%s1 + $0x14] sm:$0x1]
    %v102 = vld [vmem:[%s1 + $0x15] sm:$0x1]
    %v103 = vld [vmem:[%s1 + $0x16] sm:$0x1]
    %v104 = vld [vmem:[%s1 + $0x17] sm:$0x1]
    %v105 = vld [vmem:[%s1 + $0x18] sm:$0x1]
    %v106 = vld [vmem:[%s1 + $0x19] sm:$0x1]
    %v107 = vld [vmem:[%s1 + $0x1a] sm:$0x1]
    %v108 = vld [vmem:[%s1 + $0x1b] sm:$0x1]
    %v109 = vld [vmem:[%s1 + $0x1c] sm:$0x1]
    %v110 = vld [vmem:[%s1 + $0x1d] sm:$0x1]
    %v111 = vld [vmem:[%s1 + $0x1e] sm:$0x1]
    %v112 = vld [vmem:[%s1 + $0x1f] sm:$0x1]
    %v113 = vld [vmem:[#allocation2] sm:$0xf]
    %v114 = vld [vmem:[#allocation2 + $0x4] sm:$0xf]
    %v115 = vld [vmem:[#allocation2 + $0x8] sm:$0xf]
    %v116 = vld [vmem:[#allocation2 + $0xc] sm:$0xf]
    %v117 = vld [vmem:[#allocation2 + $0x10] sm:$0xf]
    %v118 = vld [vmem:[#allocation2 + $0x14] sm:$0xf]
    %v119 = vld [vmem:[#allocation2 + $0x18] sm:$0xf]
    %v120 = vld [vmem:[#allocation2 + $0x1c] sm:$0xf]
    %v121 = vld [vmem:[#allocation2 + $0x20] sm:$0xf]
    %v122 = vld [vmem:[#allocation2 + $0x24] sm:$0xf]
    %v123 = vld [vmem:[#allocation2 + $0x28] sm:$0xf]
    %v124 = vld [vmem:[#allocation2 + $0x2c] sm:$0xf]
    %v125 = vld [vmem:[#allocation2 + $0x30] sm:$0xf]
    %v126 = vld [vmem:[#allocation2 + $0x34] sm:$0xf]
    %v127 = vld [vmem:[#allocation2 + $0x38] sm:$0xf]
    %v128 = vld [vmem:[#allocation2 + $0x3c] sm:$0xf]
    %v129 = vld [vmem:[#allocation2 + $0x40] sm:$0xf]
    %v130 = vld [vmem:[#allocation2 + $0x44] sm:$0xf]
    %v131 = vld [vmem:[#allocation2 + $0x48] sm:$0xf]
    %v132 = vld [vmem:[#allocation2 + $0x4c] sm:$0xf]
    %v133 = vld [vmem:[#allocation2 + $0x50] sm:$0xf]
    %v134 = vld [vmem:[#allocation2 + $0x54] sm:$0xf]
    %v135 = vld [vmem:[#allocation2 + $0x58] sm:$0xf]
    %v136 = vld [vmem:[#allocation2 + $0x5c] sm:$0xf]
    %v137 = vld [vmem:[#allocation2 + $0x60] sm:$0xf]
    %v138 = vld [vmem:[#allocation2 + $0x64] sm:$0xf]
    %v139 = vld [vmem:[#allocation2 + $0x68] sm:$0xf]
    %v140 = vld [vmem:[#allocation2 + $0x6c] sm:$0xf]
    %v141 = vld [vmem:[#allocation2 + $0x70] sm:$0xf]
    %v142 = vld [vmem:[#allocation2 + $0x74] sm:$0xf]
    %v143 = vld [vmem:[#allocation2 + $0x78] sm:$0xf]
    %v144 = vld [vmem:[#allocation2 + $0x7c] sm:$0xf]
    %145 = vrot.lane.b32.xlu0 %v113, 64
    %v146 = vpop.permute.xlu0 %145
    %147 = vrot.lane.b32.xlu0 %v114, 64
    %v148 = vpop.permute.xlu0 %147
    %149 = vrot.lane.b32.xlu0 %v115, 64
    %v150 = vpop.permute.xlu0 %149
    %151 = vrot.lane.b32.xlu0 %v116, 64
    %v152 = vpop.permute.xlu0 %151
    %153 = vrot.lane.b32.xlu0 %v117, 64
    %v154 = vpop.permute.xlu0 %153
    %155 = vrot.lane.b32.xlu0 %v118, 64
    %v156 = vpop.permute.xlu0 %155
    %157 = vrot.lane.b32.xlu0 %v119, 64
    %v158 = vpop.permute.xlu0 %157
    %159 = vrot.lane.b32.xlu0 %v120, 64
    %v160 = vpop.permute.xlu0 %159
    %161 = vrot.lane.b32.xlu0 %v121, 64
    %v162 = vpop.permute.xlu0 %161
    %163 = vrot.lane.b32.xlu0 %v122, 64
    %v164 = vpop.permute.xlu0 %163
    %165 = vrot.lane.b32.xlu0 %v123, 64
    %v166 = vpop.permute.xlu0 %165
    %167 = vrot.lane.b32.xlu0 %v124, 64
    %v168 = vpop.permute.xlu0 %167
    %169 = vrot.lane.b32.xlu0 %v125, 64
    %v170 = vpop.permute.xlu0 %169
    %171 = vrot.lane.b32.xlu0 %v126, 64
    %v172 = vpop.permute.xlu0 %171
    %173 = vrot.lane.b32.xlu0 %v127, 64
    %v174 = vpop.permute.xlu0 %173
    %175 = vrot.lane.b32.xlu0 %v128, 64
    %v176 = vpop.permute.xlu0 %175
    %177 = vrot.lane.b32.xlu0 %v129, 64
    %v178 = vpop.permute.xlu0 %177
    %179 = vrot.lane.b32.xlu0 %v130, 64
    %v180 = vpop.permute.xlu0 %179
    %181 = vrot.lane.b32.xlu0 %v131, 64
    %v182 = vpop.permute.xlu0 %181
    %183 = vrot.lane.b32.xlu0 %v132, 64
    %v184 = vpop.permute.xlu0 %183
    %185 = vrot.lane.b32.xlu0 %v133, 64
    %v186 = vpop.permute.xlu0 %185
    %187 = vrot.lane.b32.xlu0 %v134, 64
    %v188 = vpop.permute.xlu0 %187
    %189 = vrot.lane.b32.xlu0 %v135, 64
    %v190 = vpop.permute.xlu0 %189
    %191 = vrot.lane.b32.xlu0 %v136, 64
    %v192 = vpop.permute.xlu0 %191
    %193 = vrot.lane.b32.xlu0 %v137, 64
    %v194 = vpop.permute.xlu0 %193
    %195 = vrot.lane.b32.xlu0 %v138, 64
    %v196 = vpop.permute.xlu0 %195
    %197 = vrot.lane.b32.xlu0 %v139, 64
    %v198 = vpop.permute.xlu0 %197
    %199 = vrot.lane.b32.xlu0 %v140, 64
    %v200 = vpop.permute.xlu0 %199
    %201 = vrot.lane.b32.xlu0 %v141, 64
    %v202 = vpop.permute.xlu0 %201
    %203 = vrot.lane.b32.xlu0 %v142, 64
    %v204 = vpop.permute.xlu0 %203
    %205 = vrot.lane.b32.xlu0 %v143, 64
    %v206 = vpop.permute.xlu0 %205
    %207 = vrot.lane.b32.xlu0 %v144, 64
    %v208 = vpop.permute.xlu0 %207
    %v241 = vlaneseq
    %v242 = vshrl.u32 %v241, 7
    %v243 = vsub.s32 0, %v242
    %v244 = vrot.slane %v49, %v243
    %v245 = vlaneseq
    %v246 = vshrl.u32 %v245, 7
    %v247 = vsub.s32 0, %v246
    %v248 = vrot.slane %v50, %v247
    %v249 = vlaneseq
    %v250 = vshrl.u32 %v249, 7
    %v251 = vsub.s32 0, %v250
    %v252 = vrot.slane %v51, %v251
    %v253 = vlaneseq
    %v254 = vshrl.u32 %v253, 7
    %v255 = vsub.s32 0, %v254
    %v256 = vrot.slane %v52, %v255
    %v257 = vlaneseq
    %v258 = vshrl.u32 %v257, 7
    %v259 = vsub.s32 0, %v258
    %v260 = vrot.slane %v53, %v259
    %v261 = vlaneseq
    %v262 = vshrl.u32 %v261, 7
    %v263 = vsub.s32 0, %v262
    %v264 = vrot.slane %v54, %v263
    %v265 = vlaneseq
    %v266 = vshrl.u32 %v265, 7
    %v267 = vsub.s32 0, %v266
    %v268 = vrot.slane %v55, %v267
    %v269 = vlaneseq
    %v270 = vshrl.u32 %v269, 7
    %v271 = vsub.s32 0, %v270
    %v272 = vrot.slane %v56, %v271
    %v273 = vlaneseq
    %v274 = vshrl.u32 %v273, 7
    %v275 = vsub.s32 0, %v274
    %v276 = vrot.slane %v57, %v275
    %v277 = vlaneseq
    %v278 = vshrl.u32 %v277, 7
    %v279 = vsub.s32 0, %v278
    %v280 = vrot.slane %v58, %v279
    %v281 = vlaneseq
    %v282 = vshrl.u32 %v281, 7
    %v283 = vsub.s32 0, %v282
    %v284 = vrot.slane %v59, %v283
    %v285 = vlaneseq
    %v286 = vshrl.u32 %v285, 7
    %v287 = vsub.s32 0, %v286
    %v288 = vrot.slane %v60, %v287
    %v289 = vlaneseq
    %v290 = vshrl.u32 %v289, 7
    %v291 = vsub.s32 0, %v290
    %v292 = vrot.slane %v61, %v291
    %v293 = vlaneseq
    %v294 = vshrl.u32 %v293, 7
    %v295 = vsub.s32 0, %v294
    %v296 = vrot.slane %v62, %v295
    %v297 = vlaneseq
    %v298 = vshrl.u32 %v297, 7
    %v299 = vsub.s32 0, %v298
    %v300 = vrot.slane %v63, %v299
    %v301 = vlaneseq
    %v302 = vshrl.u32 %v301, 7
    %v303 = vsub.s32 0, %v302
    %v304 = vrot.slane %v64, %v303
    %v305 = vlaneseq
    %v306 = vshrl.u32 %v305, 7
    %v307 = vsub.s32 0, %v306
    %v308 = vrot.slane %v65, %v307
    %v309 = vlaneseq
    %v310 = vshrl.u32 %v309, 7
    %v311 = vsub.s32 0, %v310
    %v312 = vrot.slane %v66, %v311
    %v313 = vlaneseq
    %v314 = vshrl.u32 %v313, 7
    %v315 = vsub.s32 0, %v314
    %v316 = vrot.slane %v67, %v315
    %v317 = vlaneseq
    %v318 = vshrl.u32 %v317, 7
    %v319 = vsub.s32 0, %v318
    %v320 = vrot.slane %v68, %v319
    %v321 = vlaneseq
    %v322 = vshrl.u32 %v321, 7
    %v323 = vsub.s32 0, %v322
    %v324 = vrot.slane %v69, %v323
    %v325 = vlaneseq
    %v326 = vshrl.u32 %v325, 7
    %v327 = vsub.s32 0, %v326
    %v328 = vrot.slane %v70, %v327
    %v329 = vlaneseq
    %v330 = vshrl.u32 %v329, 7
    %v331 = vsub.s32 0, %v330
    %v332 = vrot.slane %v71, %v331
    %v333 = vlaneseq
    %v334 = vshrl.u32 %v333, 7
    %v335 = vsub.s32 0, %v334
    %v336 = vrot.slane %v72, %v335
    %v337 = vlaneseq
    %v338 = vshrl.u32 %v337, 7
    %v339 = vsub.s32 0, %v338
    %v340 = vrot.slane %v73, %v339
    %v341 = vlaneseq
    %v342 = vshrl.u32 %v341, 7
    %v343 = vsub.s32 0, %v342
    %v344 = vrot.slane %v74, %v343
    %v345 = vlaneseq
    %v346 = vshrl.u32 %v345, 7
    %v347 = vsub.s32 0, %v346
    %v348 = vrot.slane %v75, %v347
    %v349 = vlaneseq
    %v350 = vshrl.u32 %v349, 7
    %v351 = vsub.s32 0, %v350
    %v352 = vrot.slane %v76, %v351
    %v353 = vlaneseq
    %v354 = vshrl.u32 %v353, 7
    %v355 = vsub.s32 0, %v354
    %v356 = vrot.slane %v77, %v355
    %v357 = vlaneseq
    %v358 = vshrl.u32 %v357, 7
    %v359 = vsub.s32 0, %v358
    %v360 = vrot.slane %v78, %v359
    %v361 = vlaneseq
    %v362 = vshrl.u32 %v361, 7
    %v363 = vsub.s32 0, %v362
    %v364 = vrot.slane %v79, %v363
    %v365 = vlaneseq
    %v366 = vshrl.u32 %v365, 7
    %v367 = vsub.s32 0, %v366
    %v368 = vrot.slane %v80, %v367
    %v401 = vmul.f32 %v113, %v244
    %v402 = vmul.f32 %v114, %v248
    %v403 = vmul.f32 %v115, %v252
    %v404 = vmul.f32 %v116, %v256
    %v405 = vmul.f32 %v117, %v260
    %v406 = vmul.f32 %v118, %v264
    %v407 = vmul.f32 %v119, %v268
    %v408 = vmul.f32 %v120, %v272
    %v409 = vmul.f32 %v121, %v276
    %v410 = vmul.f32 %v122, %v280
    %v411 = vmul.f32 %v123, %v284
    %v412 = vmul.f32 %v124, %v288
    %v413 = vmul.f32 %v125, %v292
    %v414 = vmul.f32 %v126, %v296
    %v415 = vmul.f32 %v127, %v300
    %v416 = vmul.f32 %v128, %v304
    %v417 = vmul.f32 %v129, %v308
    %v418 = vmul.f32 %v130, %v312
    %v419 = vmul.f32 %v131, %v316
    %v420 = vmul.f32 %v132, %v320
    %v421 = vmul.f32 %v133, %v324
    %v422 = vmul.f32 %v134, %v328
    %v423 = vmul.f32 %v135, %v332
    %v424 = vmul.f32 %v136, %v336
    %v425 = vmul.f32 %v137, %v340
    %v426 = vmul.f32 %v138, %v344
    %v427 = vmul.f32 %v139, %v348
    %v428 = vmul.f32 %v140, %v352
    %v429 = vmul.f32 %v141, %v356
    %v430 = vmul.f32 %v142, %v360
    %v431 = vmul.f32 %v143, %v364
    %v432 = vmul.f32 %v144, %v368
    %v465 = vlaneseq
    %v466 = vshrl.u32 %v465, 7
    %v467 = vsub.s32 0, %v466
    %v468 = vrot.slane %v81, %v467
    %v469 = vlaneseq
    %v470 = vshrl.u32 %v469, 7
    %v471 = vsub.s32 0, %v470
    %v472 = vrot.slane %v82, %v471
    %v473 = vlaneseq
    %v474 = vshrl.u32 %v473, 7
    %v475 = vsub.s32 0, %v474
    %v476 = vrot.slane %v83, %v475
    %v477 = vlaneseq
    %v478 = vshrl.u32 %v477, 7
    %v479 = vsub.s32 0, %v478
    %v480 = vrot.slane %v84, %v479
    %v481 = vlaneseq
    %v482 = vshrl.u32 %v481, 7
    %v483 = vsub.s32 0, %v482
    %v484 = vrot.slane %v85, %v483
    %v485 = vlaneseq
    %v486 = vshrl.u32 %v485, 7
    %v487 = vsub.s32 0, %v486
    %v488 = vrot.slane %v86, %v487
    %v489 = vlaneseq
    %v490 = vshrl.u32 %v489, 7
    %v491 = vsub.s32 0, %v490
    %v492 = vrot.slane %v87, %v491
    %v493 = vlaneseq
    %v494 = vshrl.u32 %v493, 7
    %v495 = vsub.s32 0, %v494
    %v496 = vrot.slane %v88, %v495
    %v497 = vlaneseq
    %v498 = vshrl.u32 %v497, 7
    %v499 = vsub.s32 0, %v498
    %v500 = vrot.slane %v89, %v499
    %v501 = vlaneseq
    %v502 = vshrl.u32 %v501, 7
    %v503 = vsub.s32 0, %v502
    %v504 = vrot.slane %v90, %v503
    %v505 = vlaneseq
    %v506 = vshrl.u32 %v505, 7
    %v507 = vsub.s32 0, %v506
    %v508 = vrot.slane %v91, %v507
    %v509 = vlaneseq
    %v510 = vshrl.u32 %v509, 7
    %v511 = vsub.s32 0, %v510
    %v512 = vrot.slane %v92, %v511
    %v513 = vlaneseq
    %v514 = vshrl.u32 %v513, 7
    %v515 = vsub.s32 0, %v514
    %v516 = vrot.slane %v93, %v515
    %v517 = vlaneseq
    %v518 = vshrl.u32 %v517, 7
    %v519 = vsub.s32 0, %v518
    %v520 = vrot.slane %v94, %v519
    %v521 = vlaneseq
    %v522 = vshrl.u32 %v521, 7
    %v523 = vsub.s32 0, %v522
    %v524 = vrot.slane %v95, %v523
    %v525 = vlaneseq
    %v526 = vshrl.u32 %v525, 7
    %v527 = vsub.s32 0, %v526
    %v528 = vrot.slane %v96, %v527
    %v529 = vlaneseq
    %v530 = vshrl.u32 %v529, 7
    %v531 = vsub.s32 0, %v530
    %v532 = vrot.slane %v97, %v531
    %v533 = vlaneseq
    %v534 = vshrl.u32 %v533, 7
    %v535 = vsub.s32 0, %v534
    %v536 = vrot.slane %v98, %v535
    %v537 = vlaneseq
    %v538 = vshrl.u32 %v537, 7
    %v539 = vsub.s32 0, %v538
    %v540 = vrot.slane %v99, %v539
    %v541 = vlaneseq
    %v542 = vshrl.u32 %v541, 7
    %v543 = vsub.s32 0, %v542
    %v544 = vrot.slane %v100, %v543
    %v545 = vlaneseq
    %v546 = vshrl.u32 %v545, 7
    %v547 = vsub.s32 0, %v546
    %v548 = vrot.slane %v101, %v547
    %v549 = vlaneseq
    %v550 = vshrl.u32 %v549, 7
    %v551 = vsub.s32 0, %v550
    %v552 = vrot.slane %v102, %v551
    %v553 = vlaneseq
    %v554 = vshrl.u32 %v553, 7
    %v555 = vsub.s32 0, %v554
    %v556 = vrot.slane %v103, %v555
    %v557 = vlaneseq
    %v558 = vshrl.u32 %v557, 7
    %v559 = vsub.s32 0, %v558
    %v560 = vrot.slane %v104, %v559
    %v561 = vlaneseq
    %v562 = vshrl.u32 %v561, 7
    %v563 = vsub.s32 0, %v562
    %v564 = vrot.slane %v105, %v563
    %v565 = vlaneseq
    %v566 = vshrl.u32 %v565, 7
    %v567 = vsub.s32 0, %v566
    %v568 = vrot.slane %v106, %v567
    %v569 = vlaneseq
    %v570 = vshrl.u32 %v569, 7
    %v571 = vsub.s32 0, %v570
    %v572 = vrot.slane %v107, %v571
    %v573 = vlaneseq
    %v574 = vshrl.u32 %v573, 7
    %v575 = vsub.s32 0, %v574
    %v576 = vrot.slane %v108, %v575
    %v577 = vlaneseq
    %v578 = vshrl.u32 %v577, 7
    %v579 = vsub.s32 0, %v578
    %v580 = vrot.slane %v109, %v579
    %v581 = vlaneseq
    %v582 = vshrl.u32 %v581, 7
    %v583 = vsub.s32 0, %v582
    %v584 = vrot.slane %v110, %v583
    %v585 = vlaneseq
    %v586 = vshrl.u32 %v585, 7
    %v587 = vsub.s32 0, %v586
    %v588 = vrot.slane %v111, %v587
    %v589 = vlaneseq
    %v590 = vshrl.u32 %v589, 7
    %v591 = vsub.s32 0, %v590
    %v592 = vrot.slane %v112, %v591
    %v625 = vmul.f32 %v146, %v468
    %v626 = vmul.f32 %v148, %v472
    %v627 = vmul.f32 %v150, %v476
    %v628 = vmul.f32 %v152, %v480
    %v629 = vmul.f32 %v154, %v484
    %v630 = vmul.f32 %v156, %v488
    %v631 = vmul.f32 %v158, %v492
    %v632 = vmul.f32 %v160, %v496
    %v633 = vmul.f32 %v162, %v500
    %v634 = vmul.f32 %v164, %v504
    %v635 = vmul.f32 %v166, %v508
    %v636 = vmul.f32 %v168, %v512
    %v637 = vmul.f32 %v170, %v516
    %v638 = vmul.f32 %v172, %v520
    %v639 = vmul.f32 %v174, %v524
    %v640 = vmul.f32 %v176, %v528
    %v641 = vmul.f32 %v178, %v532
    %v642 = vmul.f32 %v180, %v536
    %v643 = vmul.f32 %v182, %v540
    %v644 = vmul.f32 %v184, %v544
    %v645 = vmul.f32 %v186, %v548
    %v646 = vmul.f32 %v188, %v552
    %v647 = vmul.f32 %v190, %v556
    %v648 = vmul.f32 %v192, %v560
    %v649 = vmul.f32 %v194, %v564
    %v650 = vmul.f32 %v196, %v568
    %v651 = vmul.f32 %v198, %v572
    %v652 = vmul.f32 %v200, %v576
    %v653 = vmul.f32 %v202, %v580
    %v654 = vmul.f32 %v204, %v584
    %v655 = vmul.f32 %v206, %v588
    %v656 = vmul.f32 %v208, %v592
    %v657 = vadd.f32 %v401, %v625
    %v658 = vadd.f32 %v402, %v626
    %v659 = vadd.f32 %v403, %v627
    %v660 = vadd.f32 %v404, %v628
    %v661 = vadd.f32 %v405, %v629
    %v662 = vadd.f32 %v406, %v630
    %v663 = vadd.f32 %v407, %v631
    %v664 = vadd.f32 %v408, %v632
    %v665 = vadd.f32 %v409, %v633
    %v666 = vadd.f32 %v410, %v634
    %v667 = vadd.f32 %v411, %v635
    %v668 = vadd.f32 %v412, %v636
    %v669 = vadd.f32 %v413, %v637
    %v670 = vadd.f32 %v414, %v638
    %v671 = vadd.f32 %v415, %v639
    %v672 = vadd.f32 %v416, %v640
    %v673 = vadd.f32 %v417, %v641
    %v674 = vadd.f32 %v418, %v642
    %v675 = vadd.f32 %v419, %v643
    %v676 = vadd.f32 %v420, %v644
    %v677 = vadd.f32 %v421, %v645
    %v678 = vadd.f32 %v422, %v646
    %v679 = vadd.f32 %v423, %v647
    %v680 = vadd.f32 %v424, %v648
    %v681 = vadd.f32 %v425, %v649
    %v682 = vadd.f32 %v426, %v650
    %v683 = vadd.f32 %v427, %v651
    %v684 = vadd.f32 %v428, %v652
    %v685 = vadd.f32 %v429, %v653
    %v686 = vadd.f32 %v430, %v654
    %v687 = vadd.f32 %v431, %v655
    %v688 = vadd.f32 %v432, %v656
    %689 = vst [vmem:[#allocation7] sm:$0xf] %v657
    %690 = vst [vmem:[#allocation7 + $0x4] sm:$0xf] %v658
    %691 = vst [vmem:[#allocation7 + $0x8] sm:$0xf] %v659
    %692 = vst [vmem:[#allocation7 + $0xc] sm:$0xf] %v660
    %693 = vst [vmem:[#allocation7 + $0x10] sm:$0xf] %v661
    %694 = vst [vmem:[#allocation7 + $0x14] sm:$0xf] %v662
    %695 = vst [vmem:[#allocation7 + $0x18] sm:$0xf] %v663
    %696 = vst [vmem:[#allocation7 + $0x1c] sm:$0xf] %v664
    %697 = vst [vmem:[#allocation7 + $0x20] sm:$0xf] %v665
    %698 = vst [vmem:[#allocation7 + $0x24] sm:$0xf] %v666
    %699 = vst [vmem:[#allocation7 + $0x28] sm:$0xf] %v667
    %700 = vst [vmem:[#allocation7 + $0x2c] sm:$0xf] %v668
    %701 = vst [vmem:[#allocation7 + $0x30] sm:$0xf] %v669
    %702 = vst [vmem:[#allocation7 + $0x34] sm:$0xf] %v670
    %703 = vst [vmem:[#allocation7 + $0x38] sm:$0xf] %v671
    %704 = vst [vmem:[#allocation7 + $0x3c] sm:$0xf] %v672
    %705 = vst [vmem:[#allocation7 + $0x40] sm:$0xf] %v673
    %706 = vst [vmem:[#allocation7 + $0x44] sm:$0xf] %v674
    %707 = vst [vmem:[#allocation7 + $0x48] sm:$0xf] %v675
    %708 = vst [vmem:[#allocation7 + $0x4c] sm:$0xf] %v676
    %709 = vst [vmem:[#allocation7 + $0x50] sm:$0xf] %v677
    %710 = vst [vmem:[#allocation7 + $0x54] sm:$0xf] %v678
    %711 = vst [vmem:[#allocation7 + $0x58] sm:$0xf] %v679
    %712 = vst [vmem:[#allocation7 + $0x5c] sm:$0xf] %v680
    %713 = vst [vmem:[#allocation7 + $0x60] sm:$0xf] %v681
    %714 = vst [vmem:[#allocation7 + $0x64] sm:$0xf] %v682
    %715 = vst [vmem:[#allocation7 + $0x68] sm:$0xf] %v683
    %716 = vst [vmem:[#allocation7 + $0x6c] sm:$0xf] %v684
    %717 = vst [vmem:[#allocation7 + $0x70] sm:$0xf] %v685
    %718 = vst [vmem:[#allocation7 + $0x74] sm:$0xf] %v686
    %719 = vst [vmem:[#allocation7 + $0x78] sm:$0xf] %v687
    %720 = vst [vmem:[#allocation7 + $0x7c] sm:$0xf] %v688
    %v721 = vld [vmem:[#allocation5] sm:$0x3]
    %v722 = vld [vmem:[#allocation5 + $0x2] sm:$0x3]
    %v723 = vld [vmem:[#allocation5 + $0x4] sm:$0x3]
    %v724 = vld [vmem:[#allocation5 + $0x6] sm:$0x3]
    %v725 = vld [vmem:[#allocation5 + $0x8] sm:$0x3]
    %v726 = vld [vmem:[#allocation5 + $0xa] sm:$0x3]
    %v727 = vld [vmem:[#allocation5 + $0xc] sm:$0x3]
    %v728 = vld [vmem:[#allocation5 + $0xe] sm:$0x3]
    %v729 = vld [vmem:[#allocation5 + $0x10] sm:$0x3]
    %v730 = vld [vmem:[#allocation5 + $0x12] sm:$0x3]
    %v731 = vld [vmem:[#allocation5 + $0x14] sm:$0x3]
    %v732 = vld [vmem:[#allocation5 + $0x16] sm:$0x3]
    %v733 = vld [vmem:[#allocation5 + $0x18] sm:$0x3]
    %v734 = vld [vmem:[#allocation5 + $0x1a] sm:$0x3]
    %v735 = vld [vmem:[#allocation5 + $0x1c] sm:$0x3]
    %v736 = vld [vmem:[#allocation5 + $0x1e] sm:$0x3]
    %v737 = vld [vmem:[#allocation5 + $0x20] sm:$0x3]
    %v738 = vld [vmem:[#allocation5 + $0x22] sm:$0x3]
    %v739 = vld [vmem:[#allocation5 + $0x24] sm:$0x3]
    %v740 = vld [vmem:[#allocation5 + $0x26] sm:$0x3]
    %v741 = vld [vmem:[#allocation5 + $0x28] sm:$0x3]
    %v742 = vld [vmem:[#allocation5 + $0x2a] sm:$0x3]
    %v743 = vld [vmem:[#allocation5 + $0x2c] sm:$0x3]
    %v744 = vld [vmem:[#allocation5 + $0x2e] sm:$0x3]
    %v745 = vld [vmem:[#allocation5 + $0x30] sm:$0x3]
    %v746 = vld [vmem:[#allocation5 + $0x32] sm:$0x3]
    %v747 = vld [vmem:[#allocation5 + $0x34] sm:$0x3]
    %v748 = vld [vmem:[#allocation5 + $0x36] sm:$0x3]
    %v749 = vld [vmem:[#allocation5 + $0x38] sm:$0x3]
    %v750 = vld [vmem:[#allocation5 + $0x3a] sm:$0x3]
    %v751 = vld [vmem:[#allocation5 + $0x3c] sm:$0x3]
    %v752 = vld [vmem:[#allocation5 + $0x3e] sm:$0x3]
    %753 = vrot.lane.b32.xlu0 %v721, 64
    %v754 = vpop.permute.xlu0 %753
    %755 = vrot.lane.b32.xlu0 %v722, 64
    %v756 = vpop.permute.xlu0 %755
    %757 = vrot.lane.b32.xlu0 %v723, 64
    %v758 = vpop.permute.xlu0 %757
    %759 = vrot.lane.b32.xlu0 %v724, 64
    %v760 = vpop.permute.xlu0 %759
    %761 = vrot.lane.b32.xlu0 %v725, 64
    %v762 = vpop.permute.xlu0 %761
    %763 = vrot.lane.b32.xlu0 %v726, 64
    %v764 = vpop.permute.xlu0 %763
    %765 = vrot.lane.b32.xlu0 %v727, 64
    %v766 = vpop.permute.xlu0 %765
    %767 = vrot.lane.b32.xlu0 %v728, 64
    %v768 = vpop.permute.xlu0 %767
    %769 = vrot.lane.b32.xlu0 %v729, 64
    %v770 = vpop.permute.xlu0 %769
    %771 = vrot.lane.b32.xlu0 %v730, 64
    %v772 = vpop.permute.xlu0 %771
    %773 = vrot.lane.b32.xlu0 %v731, 64
    %v774 = vpop.permute.xlu0 %773
    %775 = vrot.lane.b32.xlu0 %v732, 64
    %v776 = vpop.permute.xlu0 %775
    %777 = vrot.lane.b32.xlu0 %v733, 64
    %v778 = vpop.permute.xlu0 %777
    %779 = vrot.lane.b32.xlu0 %v734, 64
    %v780 = vpop.permute.xlu0 %779
    %781 = vrot.lane.b32.xlu0 %v735, 64
    %v782 = vpop.permute.xlu0 %781
    %783 = vrot.lane.b32.xlu0 %v736, 64
    %v784 = vpop.permute.xlu0 %783
    %785 = vrot.lane.b32.xlu0 %v737, 64
    %v786 = vpop.permute.xlu0 %785
    %787 = vrot.lane.b32.xlu0 %v738, 64
    %v788 = vpop.permute.xlu0 %787
    %789 = vrot.lane.b32.xlu0 %v739, 64
    %v790 = vpop.permute.xlu0 %789
    %791 = vrot.lane.b32.xlu0 %v740, 64
    %v792 = vpop.permute.xlu0 %791
    %793 = vrot.lane.b32.xlu0 %v741, 64
    %v794 = vpop.permute.xlu0 %793
    %795 = vrot.lane.b32.xlu0 %v742, 64
    %v796 = vpop.permute.xlu0 %795
    %797 = vrot.lane.b32.xlu0 %v743, 64
    %v798 = vpop.permute.xlu0 %797
    %799 = vrot.lane.b32.xlu0 %v744, 64
    %v800 = vpop.permute.xlu0 %799
    %801 = vrot.lane.b32.xlu0 %v745, 64
    %v802 = vpop.permute.xlu0 %801
    %803 = vrot.lane.b32.xlu0 %v746, 64
    %v804 = vpop.permute.xlu0 %803
    %805 = vrot.lane.b32.xlu0 %v747, 64
    %v806 = vpop.permute.xlu0 %805
    %807 = vrot.lane.b32.xlu0 %v748, 64
    %v808 = vpop.permute.xlu0 %807
    %809 = vrot.lane.b32.xlu0 %v749, 64
    %v810 = vpop.permute.xlu0 %809
    %811 = vrot.lane.b32.xlu0 %v750, 64
    %v812 = vpop.permute.xlu0 %811
    %813 = vrot.lane.b32.xlu0 %v751, 64
    %v814 = vpop.permute.xlu0 %813
    %815 = vrot.lane.b32.xlu0 %v752, 64
    %v816 = vpop.permute.xlu0 %815
    %v817 = vmul.f32 %v721, %v244
    %v818 = vmul.f32 %v722, %v248
    %v819 = vmul.f32 %v723, %v252
    %v820 = vmul.f32 %v724, %v256
    %v821 = vmul.f32 %v725, %v260
    %v822 = vmul.f32 %v726, %v264
    %v823 = vmul.f32 %v727, %v268
    %v824 = vmul.f32 %v728, %v272
    %v825 = vmul.f32 %v729, %v276
    %v826 = vmul.f32 %v730, %v280
    %v827 = vmul.f32 %v731, %v284
    %v828 = vmul.f32 %v732, %v288
    %v829 = vmul.f32 %v733, %v292
    %v830 = vmul.f32 %v734, %v296
    %v831 = vmul.f32 %v735, %v300
    %v832 = vmul.f32 %v736, %v304
    %v833 = vmul.f32 %v737, %v308
    %v834 = vmul.f32 %v738, %v312
    %v835 = vmul.f32 %v739, %v316
    %v836 = vmul.f32 %v740, %v320
    %v837 = vmul.f32 %v741, %v324
    %v838 = vmul.f32 %v742, %v328
    %v839 = vmul.f32 %v743, %v332
    %v840 = vmul.f32 %v744, %v336
    %v841 = vmul.f32 %v745, %v340
    %v842 = vmul.f32 %v746, %v344
    %v843 = vmul.f32 %v747, %v348
    %v844 = vmul.f32 %v748, %v352
    %v845 = vmul.f32 %v749, %v356
    %v846 = vmul.f32 %v750, %v360
    %v847 = vmul.f32 %v751, %v364
    %v848 = vmul.f32 %v752, %v368
    %v849 = vmul.f32 %v754, %v468
    %v850 = vmul.f32 %v756, %v472
    %v851 = vmul.f32 %v758, %v476
    %v852 = vmul.f32 %v760, %v480
    %v853 = vmul.f32 %v762, %v484
    %v854 = vmul.f32 %v764, %v488
    %v855 = vmul.f32 %v766, %v492
    %v856 = vmul.f32 %v768, %v496
    %v857 = vmul.f32 %v770, %v500
    %v858 = vmul.f32 %v772, %v504
    %v859 = vmul.f32 %v774, %v508
    %v860 = vmul.f32 %v776, %v512
    %v861 = vmul.f32 %v778, %v516
    %v862 = vmul.f32 %v780, %v520
    %v863 = vmul.f32 %v782, %v524
    %v864 = vmul.f32 %v784, %v528
    %v865 = vmul.f32 %v786, %v532
    %v866 = vmul.f32 %v788, %v536
    %v867 = vmul.f32 %v790, %v540
    %v868 = vmul.f32 %v792, %v544
    %v869 = vmul.f32 %v794, %v548
    %v870 = vmul.f32 %v796, %v552
    %v871 = vmul.f32 %v798, %v556
    %v872 = vmul.f32 %v800, %v560
    %v873 = vmul.f32 %v802, %v564
    %v874 = vmul.f32 %v804, %v568
    %v875 = vmul.f32 %v806, %v572
    %v876 = vmul.f32 %v808, %v576
    %v877 = vmul.f32 %v810, %v580
    %v878 = vmul.f32 %v812, %v584
    %v879 = vmul.f32 %v814, %v588
    %v880 = vmul.f32 %v816, %v592
    %v881 = vadd.f32 %v817, %v849
    %v882 = vadd.f32 %v818, %v850
    %v883 = vadd.f32 %v819, %v851
    %v884 = vadd.f32 %v820, %v852
    %v885 = vadd.f32 %v821, %v853
    %v886 = vadd.f32 %v822, %v854
    %v887 = vadd.f32 %v823, %v855
    %v888 = vadd.f32 %v824, %v856
    %v889 = vadd.f32 %v825, %v857
    %v890 = vadd.f32 %v826, %v858
    %v891 = vadd.f32 %v827, %v859
    %v892 = vadd.f32 %v828, %v860
    %v893 = vadd.f32 %v829, %v861
    %v894 = vadd.f32 %v830, %v862
    %v895 = vadd.f32 %v831, %v863
    %v896 = vadd.f32 %v832, %v864
    %v897 = vadd.f32 %v833, %v865
    %v898 = vadd.f32 %v834, %v866
    %v899 = vadd.f32 %v835, %v867
    %v900 = vadd.f32 %v836, %v868
    %v901 = vadd.f32 %v837, %v869
    %v902 = vadd.f32 %v838, %v870
    %v903 = vadd.f32 %v839, %v871
    %v904 = vadd.f32 %v840, %v872
    %v905 = vadd.f32 %v841, %v873
    %v906 = vadd.f32 %v842, %v874
    %v907 = vadd.f32 %v843, %v875
    %v908 = vadd.f32 %v844, %v876
    %v909 = vadd.f32 %v845, %v877
    %v910 = vadd.f32 %v846, %v878
    %v911 = vadd.f32 %v847, %v879
    %v912 = vadd.f32 %v848, %v880
    %913 = vst [vmem:[#allocation8] sm:$0x3] %v881
    %914 = vst [vmem:[#allocation8 + $0x2] sm:$0x3] %v882
    %915 = vst [vmem:[#allocation8 + $0x4] sm:$0x3] %v883
    %916 = vst [vmem:[#allocation8 + $0x6] sm:$0x3] %v884
    %917 = vst [vmem:[#allocation8 + $0x8] sm:$0x3] %v885
    %918 = vst [vmem:[#allocation8 + $0xa] sm:$0x3] %v886
    %919 = vst [vmem:[#allocation8 + $0xc] sm:$0x3] %v887
    %920 = vst [vmem:[#allocation8 + $0xe] sm:$0x3] %v888
    %921 = vst [vmem:[#allocation8 + $0x10] sm:$0x3] %v889
    %922 = vst [vmem:[#allocation8 + $0x12] sm:$0x3] %v890
    %923 = vst [vmem:[#allocation8 + $0x14] sm:$0x3] %v891
    %924 = vst [vmem:[#allocation8 + $0x16] sm:$0x3] %v892
    %925 = vst [vmem:[#allocation8 + $0x18] sm:$0x3] %v893
    %926 = vst [vmem:[#allocation8 + $0x1a] sm:$0x3] %v894
    %927 = vst [vmem:[#allocation8 + $0x1c] sm:$0x3] %v895
    %928 = vst [vmem:[#allocation8 + $0x1e] sm:$0x3] %v896
    %929 = vst [vmem:[#allocation8 + $0x20] sm:$0x3] %v897
    %930 = vst [vmem:[#allocation8 + $0x22] sm:$0x3] %v898
    %931 = vst [vmem:[#allocation8 + $0x24] sm:$0x3] %v899
    %932 = vst [vmem:[#allocation8 + $0x26] sm:$0x3] %v900
    %933 = vst [vmem:[#allocation8 + $0x28] sm:$0x3] %v901
    %934 = vst [vmem:[#allocation8 + $0x2a] sm:$0x3] %v902
    %935 = vst [vmem:[#allocation8 + $0x2c] sm:$0x3] %v903
    %936 = vst [vmem:[#allocation8 + $0x2e] sm:$0x3] %v904
    %937 = vst [vmem:[#allocation8 + $0x30] sm:$0x3] %v905
    %938 = vst [vmem:[#allocation8 + $0x32] sm:$0x3] %v906
    %939 = vst [vmem:[#allocation8 + $0x34] sm:$0x3] %v907
    %940 = vst [vmem:[#allocation8 + $0x36] sm:$0x3] %v908
    %941 = vst [vmem:[#allocation8 + $0x38] sm:$0x3] %v909
    %942 = vst [vmem:[#allocation8 + $0x3a] sm:$0x3] %v910
    %943 = vst [vmem:[#allocation8 + $0x3c] sm:$0x3] %v911
    %944 = vst [vmem:[#allocation8 + $0x3e] sm:$0x3] %v912
    // Predicated region
    $region26: #{position_rotary_embedding_forward.1} parent=1 // pred_check
      _
    $region27: #{position_rotary_embedding_forward.1} parent=1 // pred_check_branch
      %946 = sbr.rel (0) target = $region29
    $region28: #{position_rotary_embedding_forward.1} parent=1 // pred_region
      %s948 = ssub.s32 2048, 2048
      %949 = vsyncadd [#allocation4], %s948
      %s950 = sshll.u32 [#allocation7], 4
      %s951 = int_to_ptr.vmem [resolvable:$true] %s950
      %956 = dma.vmem_to_hbm [thread:$0]  %s951, 2048, %s4, [#allocation4], 64, 64, 4
    $region29: #{position_rotary_embedding_forward.1} parent=1 // pred_fallthru
      _
    // Predicated region
    $region30: #{position_rotary_embedding_forward.1} parent=1 // pred_check
      _
    $region31: #{position_rotary_embedding_forward.1} parent=1 // pred_check_branch
      %958 = sbr.rel (0) target = $region33
    $region32: #{position_rotary_embedding_forward.1} parent=1 // pred_region
      %s960 = ssub.s32 1024, 1024
      %961 = vsyncadd [#allocation9], %s960
      %s962 = sshll.u32 [#allocation8], 4
      %s963 = int_to_ptr.vmem [resolvable:$true] %s962
      %968 = dma.vmem_to_hbm [thread:$0]  %s963, 1024, %s5, [#allocation9], 32, 32, 2
    $region33: #{position_rotary_embedding_forward.1} parent=1 // pred_fallthru
      _
    // Predicated region
    $region34: #{position_rotary_embedding_forward.1} parent=1 // pred_check
      _
    $region35: #{position_rotary_embedding_forward.1} parent=1 // pred_check_branch
      %970 = sbr.rel (0) target = $region37
    $region36: #{position_rotary_embedding_forward.1} parent=1 // pred_region
      %971 = dma.done [#allocation4], 2048
    $region37: #{position_rotary_embedding_forward.1} parent=1 // pred_fallthru
      _
    // Predicated region
    $region38: #{position_rotary_embedding_forward.1} parent=1 // pred_check
      _
    $region39: #{position_rotary_embedding_forward.1} parent=1 // pred_check_branch
      %973 = sbr.rel (0) target = $region41
    $region40: #{position_rotary_embedding_forward.1} parent=1 // pred_region
      %974 = dma.done [#allocation9], 1024
    $region41: #{position_rotary_embedding_forward.1} parent=1 // pred_fallthru
      _
    %975 = vsyncpa [#allocation3], 1
    %976 = vsyncpa [#allocation6], 1
    %977 = vsyncpa [#allocation4], 1
    %978 = vsyncpa [#allocation9], 1

</llo_original>
